<compile_context>
chip_gen: v5e
topology: v5e:2x2
jax: 0.10.0
libtpu: 0.0.40
codegen_flags: <defaults>
</compile_context>

<pallas_src>
import functools

import jax
import jax.numpy as jnp
from jax.experimental import pallas as pl
from jax.experimental.pallas import tpu as pltpu

LANE = 128
MIN_TILE = 16   # smallest batch tile (multiple of bf16 sublane packing)


def _pad_to(n, m):
    return ((n + m - 1) // m) * m


def ae_kernel(
    x_ref,
    w_e1, b_e1, w_e2, b_e2, w_e3, b_e3,
    w_z, b_z,                                  # fused z_layer1 @ z_layer2
    w_d0, b_d0, w_d1, b_d1, w_d2, b_d2, w_d3, b_d3,
    w_xb, b_xb,
    out_ref,
    *, out_layout,
):
    """Whole AE forward (9 Linear layers + ReLUs) on one batch tile.

    Matmuls run with the weights' storage dtype (bf16 fast path / f32 exact
    path) and f32 accumulation; bias-add and ReLU are f32 on the VPU.
    Each output segment is written to the packed slab as soon as it exists.
    """

    def lin(h, w_r, b_r):
        w = w_r[...]
        y = jnp.dot(h.astype(w.dtype), w, preferred_element_type=jnp.float32)
        return y + b_r[...]                    # bias add in f32

    def relu(h):
        return jnp.maximum(h, 0.0)

    def store(idx, act):
        start, width = out_layout[idx]
        out_ref[:, start:start + width] = act[:, :width].astype(out_ref.dtype)

    x = x_ref[...]

    enc_z2 = relu(lin(x, w_e1, b_e1))
    store(1, enc_z2)
    enc_z3 = relu(lin(enc_z2, w_e2, b_e2))
    store(2, enc_z3)
    enc_z4 = relu(lin(enc_z3, w_e3, b_e3))
    store(3, enc_z4)
    z2 = lin(enc_z4, w_z, b_z)                 # fused bottleneck (no ReLU between)
    store(4, z2)
    dec_z1 = relu(lin(z2, w_d0, b_d0))
    dec_z2 = relu(lin(dec_z1, w_d1, b_d1))
    dec_z3 = relu(lin(dec_z2, w_d2, b_d2))
    dec_z4 = relu(lin(dec_z3, w_d3, b_d3))
    x_bar = lin(dec_z4, w_xb, b_xb)
    store(0, x_bar)


def _choose_batch_tile(B, x_row_bytes, out_row_bytes, weight_bytes, vmem_budget):
    """Largest tile that fits the VMEM budget without over-padding the batch,
    then halved if needed so the parallel grid has >= 2 steps (v7x megacore)."""
    cap = max(_pad_to(B, MIN_TILE), MIN_TILE)
    bt = MIN_TILE
    for cand in (2048, 1024, 512, 256, 128, 64, 32, 16):
        if cand > cap:
            continue
        tile_bytes = 2 * cand * (x_row_bytes + out_row_bytes)   # double-buffered
        if tile_bytes + 2 * weight_bytes + (2 << 20) <= vmem_budget:
            bt = cand
            break
    while bt > MIN_TILE and (B + bt - 1) // bt < 2:
        bt //= 2
    return bt


def ae_forward(x, params, *, batch_tile=None, use_bf16=True):
    """params is a list of 10 (W, b) with W: (in, out), b: (1, out)."""
    B, n_input = x.shape

    n_enc_1 = params[0][0].shape[1]
    n_enc_2 = params[1][0].shape[1]
    n_enc_3 = params[2][0].shape[1]
    n_cluster = params[4][0].shape[1]
    assert params[9][0].shape[1] == n_input

    # ---- algebraic fusion of z_layer1 -> z_layer2 (exact: no ReLU between) ----
    w_z1, b_z1 = params[3]
    w_z2, b_z2 = params[4]
    w_z1 = w_z1.astype(jnp.float32); w_z2 = w_z2.astype(jnp.float32)
    w_z = w_z1 @ w_z2
    b_z = b_z1.astype(jnp.float32) @ w_z2 + b_z2.astype(jnp.float32)

    fused = [params[0], params[1], params[2], (w_z, b_z)] + list(params[5:10])

    w_dtype = jnp.bfloat16 if use_bf16 else jnp.float32
    x_dtype = w_dtype   # halves the x read DMA in bf16 mode

    # ---- pad weights: K dim to previous layer's padded width, N dim to a
    #      128-lane multiple.  x / first-layer K only padded to 16 (sublane
    #      packing), keeping the x HBM read ~8x smaller than 128-lane padding.
    in_p = _pad_to(n_input, 16)

    def pad2(a, rows, cols, dtype):
        a = a.astype(jnp.float32)
        return jnp.pad(a, ((0, rows - a.shape[0]),
                           (0, cols - a.shape[1]))).astype(dtype)

    padded = []
    k_pad = in_p
    for w, b in fused:
        n_pad = _pad_to(w.shape[1], LANE)
        padded.append((pad2(w, k_pad, n_pad, w_dtype),     # bf16 (or f32) weights
                       pad2(b, 1, n_pad, jnp.float32)))    # biases stay f32
        k_pad = n_pad

    flat = []
    for w, b in padded:
        flat.extend([w, b])

    # ---- packed output slab: true widths back-to-back (8-lane aligned,
    #      descending width so no store crosses a 128-lane block), padded once
    #      to a 128-lane multiple.  Module order: x_bar, enc_z2, enc_z3,
    #      enc_z4, z2.
    out_true = [n_input, n_enc_1, n_enc_2, n_enc_3, n_cluster]
    layout = [None] * len(out_true)
    start = 0
    for i in sorted(range(len(out_true)), key=lambda i: -out_true[i]):
        layout[i] = (start, out_true[i])
        start = _pad_to(start + out_true[i], 8)
    slab_width = _pad_to(start, LANE)

    # ---- VMEM budget (generation-aware) and batch tiling ----
    try:
        vmem_cap = pltpu.get_tpu_info().vmem_capacity_bytes
    except Exception:
        vmem_cap = 64 * 2 ** 20        # v7x per-TensorCore VMEM (smallest gen)
    vmem_budget = int(vmem_cap * 0.75)  # headroom for Mosaic internal scratch

    x_row_bytes = in_p * jnp.dtype(x_dtype).itemsize
    out_row_bytes = slab_width * 4
    weight_bytes = sum(w.size * w.dtype.itemsize + b.size * 4 for w, b in padded)

    if batch_tile is None:
        batch_tile = _choose_batch_tile(B, x_row_bytes, out_row_bytes,
                                        weight_bytes, vmem_budget)
    assert batch_tile % 8 == 0

    B_pad = _pad_to(max(B, batch_tile), batch_tile)   # pad batch, never shrink M
    grid = (B_pad // batch_tile,)

    x_p = jnp.pad(x.astype(jnp.float32),
                  ((0, B_pad - B), (0, in_p - n_input))).astype(x_dtype)

    # x / output slab tiled over batch; weights & biases are whole-array
    # blocks (constant index map) that stay resident in VMEM across steps.
    x_spec = pl.BlockSpec((batch_tile, in_p), lambda i: (i, 0))
    w_specs = [pl.BlockSpec(p.shape, lambda i: (0, 0)) for p in flat]
    out_spec = pl.BlockSpec((batch_tile, slab_width), lambda i: (i, 0))

    flops = sum(2 * B_pad * w.shape[0] * w.shape[1] for w, _ in padded)
    bytes_accessed = int(x_p.size * jnp.dtype(x_dtype).itemsize
                         + B_pad * slab_width * 4 + weight_bytes)
    cost = pl.CostEstimate(flops=flops, transcendentals=0,
                           bytes_accessed=bytes_accessed)

    tile_bytes = 2 * batch_tile * (x_row_bytes + out_row_bytes)
    needed = tile_bytes + 2 * weight_bytes + (2 << 20)
    vmem_limit = int(min(max(needed, 16 * 2 ** 20), vmem_budget))

    kernel = functools.partial(ae_kernel, out_layout=tuple(layout))

    slab = pl.pallas_call(
        kernel,
        grid=grid,
        in_specs=[x_spec] + w_specs,
        out_specs=out_spec,
        out_shape=jax.ShapeDtypeStruct((B_pad, slab_width), jnp.float32),
        compiler_params=pltpu.CompilerParams(
            dimension_semantics=("parallel",),
            vmem_limit_bytes=vmem_limit,
        ),
        cost_estimate=cost,
    )(x_p, *flat)

    # Unpack the slab back into the 5 module outputs (true rows / widths).
    return tuple(slab[:B, s:s + d] for (s, d) in layout)


def ae_forward_ref(x, params):
    """Pure-JAX f32 reference (unfused, unpadded) for correctness checking."""
    def lin(h, wb):
        w, b = wb
        return h @ w + b

    enc_z2 = jax.nn.relu(lin(x, params[0]))
    enc_z3 = jax.nn.relu(lin(enc_z2, params[1]))
    enc_z4 = jax.nn.relu(lin(enc_z3, params[2]))
    z1 = lin(enc_z4, params[3])
    z2 = lin(z1, params[4])
    dec_z1 = jax.nn.relu(lin(z2, params[5]))
    dec_z2 = jax.nn.relu(lin(dec_z1, params[6]))
    dec_z3 = jax.nn.relu(lin(dec_z2, params[7]))
    dec_z4 = jax.nn.relu(lin(dec_z3, params[8]))
    x_bar = lin(dec_z4, params[9])
    return x_bar, enc_z2, enc_z3, enc_z4, z2


def init_params(key, layer_dims):
    """Deterministic init mimicking PyTorch Linear (uniform +/- 1/sqrt(fan_in))."""
    params = []
    for d_in, d_out in layer_dims:
        key, kw, kb = jax.random.split(key, 3)
        bound = 1.0 / (d_in ** 0.5)
        w = jax.random.uniform(kw, (d_in, d_out), jnp.float32, -bound, bound)
        b = jax.random.uniform(kb, (1, d_out), jnp.float32, -bound, bound)
        params.append((w, b))
    return params


if __name__ == "__main__":
    # Small, forward-consistent sizes.
    n_input, n_enc_1, n_enc_2, n_enc_3 = 16, 32, 32, 64
    n_z, n_cluster = 8, 4
    n_dec_1, n_dec_2, n_dec_3 = 64, 32, 32
    batch = 8

    layer_dims = [
        (n_input, n_enc_1),    # enc_1
        (n_enc_1, n_enc_2),    # enc_2
        (n_enc_2, n_enc_3),    # enc_3
        (n_enc_3, n_z),        # z_layer1
        (n_z, n_cluster),      # z_layer2
        (n_cluster, n_z),      # dec_0
        (n_z, n_dec_1),        # dec_1
        (n_dec_1, n_dec_2),    # dec_2
        (n_dec_2, n_dec_3),    # dec_3
        (n_dec_3, n_input),    # x_bar_layer
    ]

    key = jax.random.PRNGKey(0)
    key, kx = jax.random.split(key)
    params = init_params(key, layer_dims)
    x = jax.random.normal(kx, (batch, n_input), jnp.float32)

    refs = ae_forward_ref(x, params)
    names = ["x_bar", "enc_z2", "enc_z3", "enc_z4", "z2"]

    # Exact f32 path: must match the reference tightly.
    outs_f32 = jax.jit(functools.partial(ae_forward, use_bf16=False))(x, params)
    outs_f32 = jax.block_until_ready(outs_f32)
    for name, got, want in zip(names, outs_f32, refs):
        assert got.shape == want.shape, (name, got.shape, want.shape)
        assert jnp.allclose(got, want, atol=1e-4, rtol=1e-4), name

    # bf16-MXU fast path: looser tolerance (bf16 inputs, f32 accumulation).
    outs_bf16 = jax.jit(functools.partial(ae_forward, use_bf16=True))(x, params)
    outs_bf16 = jax.block_until_ready(outs_bf16)
    for name, got, want in zip(names, outs_bf16, refs):
        assert got.shape == want.shape, (name, got.shape, want.shape)
        assert jnp.allclose(got, want, atol=5e-2, rtol=5e-2), name

    print("KERNEL_OK")
</pallas_src>

<mosaic_0001>
module attributes {stable_mosaic.version = 11 : i64} {
  func.func @ae_kernel(%arg0: i32, %arg1: memref<16x16xf32, #tpu.memory_space<vmem>>, %arg2: memref<16x128xf32, #tpu.memory_space<vmem>>, %arg3: memref<1x128xf32, #tpu.memory_space<vmem>>, %arg4: memref<128x128xf32, #tpu.memory_space<vmem>>, %arg5: memref<1x128xf32, #tpu.memory_space<vmem>>, %arg6: memref<128x128xf32, #tpu.memory_space<vmem>>, %arg7: memref<1x128xf32, #tpu.memory_space<vmem>>, %arg8: memref<128x128xf32, #tpu.memory_space<vmem>>, %arg9: memref<1x128xf32, #tpu.memory_space<vmem>>, %arg10: memref<128x128xf32, #tpu.memory_space<vmem>>, %arg11: memref<1x128xf32, #tpu.memory_space<vmem>>, %arg12: memref<128x128xf32, #tpu.memory_space<vmem>>, %arg13: memref<1x128xf32, #tpu.memory_space<vmem>>, %arg14: memref<128x128xf32, #tpu.memory_space<vmem>>, %arg15: memref<1x128xf32, #tpu.memory_space<vmem>>, %arg16: memref<128x128xf32, #tpu.memory_space<vmem>>, %arg17: memref<1x128xf32, #tpu.memory_space<vmem>>, %arg18: memref<128x128xf32, #tpu.memory_space<vmem>>, %arg19: memref<1x128xf32, #tpu.memory_space<vmem>>, %arg20: memref<16x256xf32, #tpu.memory_space<vmem>>) attributes {dimension_semantics = [#tpu.dimension_semantics<parallel>], iteration_bounds = array<i64: 1>, scalar_prefetch = 0 : i64, scratch_operands = 0 : i64, tpu.core_type = #tpu.core_type<tc>, window_params = [{transform_indices = @transform_0, window_bounds = array<i64: 16, 16>}, {pipeline_mode = #tpu.pipeline_mode<synchronous>, transform_indices = @transform_1, window_bounds = array<i64: 16, 128>}, {pipeline_mode = #tpu.pipeline_mode<synchronous>, transform_indices = @transform_2, window_bounds = array<i64: 1, 128>}, {pipeline_mode = #tpu.pipeline_mode<synchronous>, transform_indices = @transform_3, window_bounds = array<i64: 128, 128>}, {pipeline_mode = #tpu.pipeline_mode<synchronous>, transform_indices = @transform_4, window_bounds = array<i64: 1, 128>}, {pipeline_mode = #tpu.pipeline_mode<synchronous>, transform_indices = @transform_5, window_bounds = array<i64: 128, 128>}, {pipeline_mode = #tpu.pipeline_mode<synchronous>, transform_indices = @transform_6, window_bounds = array<i64: 1, 128>}, {pipeline_mode = #tpu.pipeline_mode<synchronous>, transform_indices = @transform_7, window_bounds = array<i64: 128, 128>}, {pipeline_mode = #tpu.pipeline_mode<synchronous>, transform_indices = @transform_8, window_bounds = array<i64: 1, 128>}, {pipeline_mode = #tpu.pipeline_mode<synchronous>, transform_indices = @transform_9, window_bounds = array<i64: 128, 128>}, {pipeline_mode = #tpu.pipeline_mode<synchronous>, transform_indices = @transform_10, window_bounds = array<i64: 1, 128>}, {pipeline_mode = #tpu.pipeline_mode<synchronous>, transform_indices = @transform_11, window_bounds = array<i64: 128, 128>}, {pipeline_mode = #tpu.pipeline_mode<synchronous>, transform_indices = @transform_12, window_bounds = array<i64: 1, 128>}, {pipeline_mode = #tpu.pipeline_mode<synchronous>, transform_indices = @transform_13, window_bounds = array<i64: 128, 128>}, {pipeline_mode = #tpu.pipeline_mode<synchronous>, transform_indices = @transform_14, window_bounds = array<i64: 1, 128>}, {pipeline_mode = #tpu.pipeline_mode<synchronous>, transform_indices = @transform_15, window_bounds = array<i64: 128, 128>}, {pipeline_mode = #tpu.pipeline_mode<synchronous>, transform_indices = @transform_16, window_bounds = array<i64: 1, 128>}, {pipeline_mode = #tpu.pipeline_mode<synchronous>, transform_indices = @transform_17, window_bounds = array<i64: 128, 128>}, {pipeline_mode = #tpu.pipeline_mode<synchronous>, transform_indices = @transform_18, window_bounds = array<i64: 1, 128>}, {transform_indices = @transform_19, window_bounds = array<i64: 16, 256>}]} {
    %c0 = arith.constant 0 : index
    %c0_0 = arith.constant 0 : index
    %0 = vector.load %arg1[%c0, %c0_0] : memref<16x16xf32, #tpu.memory_space<vmem>>, vector<16x16xf32>
    %c0_1 = arith.constant 0 : index
    %c0_2 = arith.constant 0 : index
    %1 = vector.load %arg2[%c0_1, %c0_2] : memref<16x128xf32, #tpu.memory_space<vmem>>, vector<16x128xf32>
    %cst = arith.constant dense<0.000000e+00> : vector<16x128xf32>
    %2 = tpu.matmul %0, %1, %cst {dimension_numbers = #tpu.dot_dimension_numbers<[1], [0], [0], [1], [0, 0, 1, 1], [], []>} : vector<16x16xf32>, vector<16x128xf32>, vector<16x128xf32> -> vector<16x128xf32>
    %c0_3 = arith.constant 0 : index
    %c0_4 = arith.constant 0 : index
    %3 = vector.load %arg3[%c0_3, %c0_4] : memref<1x128xf32, #tpu.memory_space<vmem>>, vector<1x128xf32>
    %4 = vector.broadcast %3 : vector<1x128xf32> to vector<16x128xf32>
    %5 = arith.addf %2, %4 : vector<16x128xf32>
    %cst_5 = arith.constant 0.000000e+00 : f32
    %6 = vector.broadcast %cst_5 : f32 to vector<16x128xf32>
    %7 = arith.maximumf %5, %6 : vector<16x128xf32>
    %8 = vector.extract_strided_slice %7 {offsets = [0, 0], sizes = [16, 32], strides = [1, 1]} : vector<16x128xf32> to vector<16x32xf32>
    %c0_6 = arith.constant 0 : index
    %c64 = arith.constant 64 : index
    %9 = vector.load %arg20[%c0_6, %c64] : memref<16x256xf32, #tpu.memory_space<vmem>>, vector<16x32xf32>
    tpu.vector_store %arg20[%c0_6, %c64], %8 {strides = array<i32>} : memref<16x256xf32, #tpu.memory_space<vmem>>, vector<16x32xf32>,
    %c0_7 = arith.constant 0 : index
    %c0_8 = arith.constant 0 : index
    %10 = vector.load %arg4[%c0_7, %c0_8] : memref<128x128xf32, #tpu.memory_space<vmem>>, vector<128x128xf32>
    %cst_9 = arith.constant dense<0.000000e+00> : vector<16x128xf32>
    %11 = tpu.matmul %7, %10, %cst_9 {dimension_numbers = #tpu.dot_dimension_numbers<[1], [0], [0], [1], [0, 0, 1, 1], [], []>} : vector<16x128xf32>, vector<128x128xf32>, vector<16x128xf32> -> vector<16x128xf32>
    %c0_10 = arith.constant 0 : index
    %c0_11 = arith.constant 0 : index
    %12 = vector.load %arg5[%c0_10, %c0_11] : memref<1x128xf32, #tpu.memory_space<vmem>>, vector<1x128xf32>
    %13 = vector.broadcast %12 : vector<1x128xf32> to vector<16x128xf32>
    %14 = arith.addf %11, %13 : vector<16x128xf32>
    %cst_12 = arith.constant 0.000000e+00 : f32
    %15 = vector.broadcast %cst_12 : f32 to vector<16x128xf32>
    %16 = arith.maximumf %14, %15 : vector<16x128xf32>
    %17 = vector.extract_strided_slice %16 {offsets = [0, 0], sizes = [16, 32], strides = [1, 1]} : vector<16x128xf32> to vector<16x32xf32>
    %c0_13 = arith.constant 0 : index
    %c96 = arith.constant 96 : index
    %18 = vector.load %arg20[%c0_13, %c96] : memref<16x256xf32, #tpu.memory_space<vmem>>, vector<16x32xf32>
    tpu.vector_store %arg20[%c0_13, %c96], %17 {strides = array<i32>} : memref<16x256xf32, #tpu.memory_space<vmem>>, vector<16x32xf32>,
    %c0_14 = arith.constant 0 : index
    %c0_15 = arith.constant 0 : index
    %19 = vector.load %arg6[%c0_14, %c0_15] : memref<128x128xf32, #tpu.memory_space<vmem>>, vector<128x128xf32>
    %cst_16 = arith.constant dense<0.000000e+00> : vector<16x128xf32>
    %20 = tpu.matmul %16, %19, %cst_16 {dimension_numbers = #tpu.dot_dimension_numbers<[1], [0], [0], [1], [0, 0, 1, 1], [], []>} : vector<16x128xf32>, vector<128x128xf32>, vector<16x128xf32> -> vector<16x128xf32>
    %c0_17 = arith.constant 0 : index
    %c0_18 = arith.constant 0 : index
    %21 = vector.load %arg7[%c0_17, %c0_18] : memref<1x128xf32, #tpu.memory_space<vmem>>, vector<1x128xf32>
    %22 = vector.broadcast %21 : vector<1x128xf32> to vector<16x128xf32>
    %23 = arith.addf %20, %22 : vector<16x128xf32>
    %cst_19 = arith.constant 0.000000e+00 : f32
    %24 = vector.broadcast %cst_19 : f32 to vector<16x128xf32>
    %25 = arith.maximumf %23, %24 : vector<16x128xf32>
    %26 = vector.extract_strided_slice %25 {offsets = [0, 0], sizes = [16, 64], strides = [1, 1]} : vector<16x128xf32> to vector<16x64xf32>
    %c0_20 = arith.constant 0 : index
    %c0_21 = arith.constant 0 : index
    %27 = vector.load %arg20[%c0_20, %c0_21] : memref<16x256xf32, #tpu.memory_space<vmem>>, vector<16x64xf32>
    tpu.vector_store %arg20[%c0_20, %c0_21], %26 {strides = array<i32>} : memref<16x256xf32, #tpu.memory_space<vmem>>, vector<16x64xf32>,
    %c0_22 = arith.constant 0 : index
    %c0_23 = arith.constant 0 : index
    %28 = vector.load %arg8[%c0_22, %c0_23] : memref<128x128xf32, #tpu.memory_space<vmem>>, vector<128x128xf32>
    %cst_24 = arith.constant dense<0.000000e+00> : vector<16x128xf32>
    %29 = tpu.matmul %25, %28, %cst_24 {dimension_numbers = #tpu.dot_dimension_numbers<[1], [0], [0], [1], [0, 0, 1, 1], [], []>} : vector<16x128xf32>, vector<128x128xf32>, vector<16x128xf32> -> vector<16x128xf32>
    %c0_25 = arith.constant 0 : index
    %c0_26 = arith.constant 0 : index
    %30 = vector.load %arg9[%c0_25, %c0_26] : memref<1x128xf32, #tpu.memory_space<vmem>>, vector<1x128xf32>
    %31 = vector.broadcast %30 : vector<1x128xf32> to vector<16x128xf32>
    %32 = arith.addf %29, %31 : vector<16x128xf32>
    %33 = vector.extract_strided_slice %32 {offsets = [0, 0], sizes = [16, 4], strides = [1, 1]} : vector<16x128xf32> to vector<16x4xf32>
    %c0_27 = arith.constant 0 : index
    %c144 = arith.constant 144 : index
    %34 = vector.load %arg20[%c0_27, %c144] : memref<16x256xf32, #tpu.memory_space<vmem>>, vector<16x4xf32>
    tpu.vector_store %arg20[%c0_27, %c144], %33 {strides = array<i32>} : memref<16x256xf32, #tpu.memory_space<vmem>>, vector<16x4xf32>,
    %c0_28 = arith.constant 0 : index
    %c0_29 = arith.constant 0 : index
    %35 = vector.load %arg10[%c0_28, %c0_29] : memref<128x128xf32, #tpu.memory_space<vmem>>, vector<128x128xf32>
    %cst_30 = arith.constant dense<0.000000e+00> : vector<16x128xf32>
    %36 = tpu.matmul %32, %35, %cst_30 {dimension_numbers = #tpu.dot_dimension_numbers<[1], [0], [0], [1], [0, 0, 1, 1], [], []>} : vector<16x128xf32>, vector<128x128xf32>, vector<16x128xf32> -> vector<16x128xf32>
    %c0_31 = arith.constant 0 : index
    %c0_32 = arith.constant 0 : index
    %37 = vector.load %arg11[%c0_31, %c0_32] : memref<1x128xf32, #tpu.memory_space<vmem>>, vector<1x128xf32>
    %38 = vector.broadcast %37 : vector<1x128xf32> to vector<16x128xf32>
    %39 = arith.addf %36, %38 : vector<16x128xf32>
    %cst_33 = arith.constant 0.000000e+00 : f32
    %40 = vector.broadcast %cst_33 : f32 to vector<16x128xf32>
    %41 = arith.maximumf %39, %40 : vector<16x128xf32>
    %c0_34 = arith.constant 0 : index
    %c0_35 = arith.constant 0 : index
    %42 = vector.load %arg12[%c0_34, %c0_35] : memref<128x128xf32, #tpu.memory_space<vmem>>, vector<128x128xf32>
    %cst_36 = arith.constant dense<0.000000e+00> : vector<16x128xf32>
    %43 = tpu.matmul %41, %42, %cst_36 {dimension_numbers = #tpu.dot_dimension_numbers<[1], [0], [0], [1], [0, 0, 1, 1], [], []>} : vector<16x128xf32>, vector<128x128xf32>, vector<16x128xf32> -> vector<16x128xf32>
    %c0_37 = arith.constant 0 : index
    %c0_38 = arith.constant 0 : index
    %44 = vector.load %arg13[%c0_37, %c0_38] : memref<1x128xf32, #tpu.memory_space<vmem>>, vector<1x128xf32>
    %45 = vector.broadcast %44 : vector<1x128xf32> to vector<16x128xf32>
    %46 = arith.addf %43, %45 : vector<16x128xf32>
    %cst_39 = arith.constant 0.000000e+00 : f32
    %47 = vector.broadcast %cst_39 : f32 to vector<16x128xf32>
    %48 = arith.maximumf %46, %47 : vector<16x128xf32>
    %c0_40 = arith.constant 0 : index
    %c0_41 = arith.constant 0 : index
    %49 = vector.load %arg14[%c0_40, %c0_41] : memref<128x128xf32, #tpu.memory_space<vmem>>, vector<128x128xf32>
    %cst_42 = arith.constant dense<0.000000e+00> : vector<16x128xf32>
    %50 = tpu.matmul %48, %49, %cst_42 {dimension_numbers = #tpu.dot_dimension_numbers<[1], [0], [0], [1], [0, 0, 1, 1], [], []>} : vector<16x128xf32>, vector<128x128xf32>, vector<16x128xf32> -> vector<16x128xf32>
    %c0_43 = arith.constant 0 : index
    %c0_44 = arith.constant 0 : index
    %51 = vector.load %arg15[%c0_43, %c0_44] : memref<1x128xf32, #tpu.memory_space<vmem>>, vector<1x128xf32>
    %52 = vector.broadcast %51 : vector<1x128xf32> to vector<16x128xf32>
    %53 = arith.addf %50, %52 : vector<16x128xf32>
    %cst_45 = arith.constant 0.000000e+00 : f32
    %54 = vector.broadcast %cst_45 : f32 to vector<16x128xf32>
    %55 = arith.maximumf %53, %54 : vector<16x128xf32>
    %c0_46 = arith.constant 0 : index
    %c0_47 = arith.constant 0 : index
    %56 = vector.load %arg16[%c0_46, %c0_47] : memref<128x128xf32, #tpu.memory_space<vmem>>, vector<128x128xf32>
    %cst_48 = arith.constant dense<0.000000e+00> : vector<16x128xf32>
    %57 = tpu.matmul %55, %56, %cst_48 {dimension_numbers = #tpu.dot_dimension_numbers<[1], [0], [0], [1], [0, 0, 1, 1], [], []>} : vector<16x128xf32>, vector<128x128xf32>, vector<16x128xf32> -> vector<16x128xf32>
    %c0_49 = arith.constant 0 : index
    %c0_50 = arith.constant 0 : index
    %58 = vector.load %arg17[%c0_49, %c0_50] : memref<1x128xf32, #tpu.memory_space<vmem>>, vector<1x128xf32>
    %59 = vector.broadcast %58 : vector<1x128xf32> to vector<16x128xf32>
    %60 = arith.addf %57, %59 : vector<16x128xf32>
    %cst_51 = arith.constant 0.000000e+00 : f32
    %61 = vector.broadcast %cst_51 : f32 to vector<16x128xf32>
    %62 = arith.maximumf %60, %61 : vector<16x128xf32>
    %c0_52 = arith.constant 0 : index
    %c0_53 = arith.constant 0 : index
    %63 = vector.load %arg18[%c0_52, %c0_53] : memref<128x128xf32, #tpu.memory_space<vmem>>, vector<128x128xf32>
    %cst_54 = arith.constant dense<0.000000e+00> : vector<16x128xf32>
    %64 = tpu.matmul %62, %63, %cst_54 {dimension_numbers = #tpu.dot_dimension_numbers<[1], [0], [0], [1], [0, 0, 1, 1], [], []>} : vector<16x128xf32>, vector<128x128xf32>, vector<16x128xf32> -> vector<16x128xf32>
    %c0_55 = arith.constant 0 : index
    %c0_56 = arith.constant 0 : index
    %65 = vector.load %arg19[%c0_55, %c0_56] : memref<1x128xf32, #tpu.memory_space<vmem>>, vector<1x128xf32>
    %66 = vector.broadcast %65 : vector<1x128xf32> to vector<16x128xf32>
    %67 = arith.addf %64, %66 : vector<16x128xf32>
    %68 = vector.extract_strided_slice %67 {offsets = [0, 0], sizes = [16, 16], strides = [1, 1]} : vector<16x128xf32> to vector<16x16xf32>
    %c0_57 = arith.constant 0 : index
    %c128 = arith.constant 128 : index
    %69 = vector.load %arg20[%c0_57, %c128] : memref<16x256xf32, #tpu.memory_space<vmem>>, vector<16x16xf32>
    tpu.vector_store %arg20[%c0_57, %c128], %68 {strides = array<i32>} : memref<16x256xf32, #tpu.memory_space<vmem>>, vector<16x16xf32>,
    return
  }
  func.func @transform_0(%arg0: i32) -> (i32, i32) {
    %c0_i32 = arith.constant 0 : i32
    %c0_i32_0 = arith.constant 0 : i32
    return %arg0, %c0_i32 : i32, i32
  }
  func.func @transform_1(%arg0: i32) -> (i32, i32) {
    %c0_i32 = arith.constant 0 : i32
    %c0_i32_0 = arith.constant 0 : i32
    %c0_i32_1 = arith.constant 0 : i32
    return %c0_i32, %c0_i32_0 : i32, i32
  }
  func.func @transform_2(%arg0: i32) -> (i32, i32) {
    %c0_i32 = arith.constant 0 : i32
    %c0_i32_0 = arith.constant 0 : i32
    %c0_i32_1 = arith.constant 0 : i32
    return %c0_i32, %c0_i32_0 : i32, i32
  }
  func.func @transform_3(%arg0: i32) -> (i32, i32) {
    %c0_i32 = arith.constant 0 : i32
    %c0_i32_0 = arith.constant 0 : i32
    %c0_i32_1 = arith.constant 0 : i32
    return %c0_i32, %c0_i32_0 : i32, i32
  }
  func.func @transform_4(%arg0: i32) -> (i32, i32) {
    %c0_i32 = arith.constant 0 : i32
    %c0_i32_0 = arith.constant 0 : i32
    %c0_i32_1 = arith.constant 0 : i32
    return %c0_i32, %c0_i32_0 : i32, i32
  }
  func.func @transform_5(%arg0: i32) -> (i32, i32) {
    %c0_i32 = arith.constant 0 : i32
    %c0_i32_0 = arith.constant 0 : i32
    %c0_i32_1 = arith.constant 0 : i32
    return %c0_i32, %c0_i32_0 : i32, i32
  }
  func.func @transform_6(%arg0: i32) -> (i32, i32) {
    %c0_i32 = arith.constant 0 : i32
    %c0_i32_0 = arith.constant 0 : i32
    %c0_i32_1 = arith.constant 0 : i32
    return %c0_i32, %c0_i32_0 : i32, i32
  }
  func.func @transform_7(%arg0: i32) -> (i32, i32) {
    %c0_i32 = arith.constant 0 : i32
    %c0_i32_0 = arith.constant 0 : i32
    %c0_i32_1 = arith.constant 0 : i32
    return %c0_i32, %c0_i32_0 : i32, i32
  }
  func.func @transform_8(%arg0: i32) -> (i32, i32) {
    %c0_i32 = arith.constant 0 : i32
    %c0_i32_0 = arith.constant 0 : i32
    %c0_i32_1 = arith.constant 0 : i32
    return %c0_i32, %c0_i32_0 : i32, i32
  }
  func.func @transform_9(%arg0: i32) -> (i32, i32) {
    %c0_i32 = arith.constant 0 : i32
    %c0_i32_0 = arith.constant 0 : i32
    %c0_i32_1 = arith.constant 0 : i32
    return %c0_i32, %c0_i32_0 : i32, i32
  }
  func.func @transform_10(%arg0: i32) -> (i32, i32) {
    %c0_i32 = arith.constant 0 : i32
    %c0_i32_0 = arith.constant 0 : i32
    %c0_i32_1 = arith.constant 0 : i32
    return %c0_i32, %c0_i32_0 : i32, i32
  }
  func.func @transform_11(%arg0: i32) -> (i32, i32) {
    %c0_i32 = arith.constant 0 : i32
    %c0_i32_0 = arith.constant 0 : i32
    %c0_i32_1 = arith.constant 0 : i32
    return %c0_i32, %c0_i32_0 : i32, i32
  }
  func.func @transform_12(%arg0: i32) -> (i32, i32) {
    %c0_i32 = arith.constant 0 : i32
    %c0_i32_0 = arith.constant 0 : i32
    %c0_i32_1 = arith.constant 0 : i32
    return %c0_i32, %c0_i32_0 : i32, i32
  }
  func.func @transform_13(%arg0: i32) -> (i32, i32) {
    %c0_i32 = arith.constant 0 : i32
    %c0_i32_0 = arith.constant 0 : i32
    %c0_i32_1 = arith.constant 0 : i32
    return %c0_i32, %c0_i32_0 : i32, i32
  }
  func.func @transform_14(%arg0: i32) -> (i32, i32) {
    %c0_i32 = arith.constant 0 : i32
    %c0_i32_0 = arith.constant 0 : i32
    %c0_i32_1 = arith.constant 0 : i32
    return %c0_i32, %c0_i32_0 : i32, i32
  }
  func.func @transform_15(%arg0: i32) -> (i32, i32) {
    %c0_i32 = arith.constant 0 : i32
    %c0_i32_0 = arith.constant 0 : i32
    %c0_i32_1 = arith.constant 0 : i32
    return %c0_i32, %c0_i32_0 : i32, i32
  }
  func.func @transform_16(%arg0: i32) -> (i32, i32) {
    %c0_i32 = arith.constant 0 : i32
    %c0_i32_0 = arith.constant 0 : i32
    %c0_i32_1 = arith.constant 0 : i32
    return %c0_i32, %c0_i32_0 : i32, i32
  }
  func.func @transform_17(%arg0: i32) -> (i32, i32) {
    %c0_i32 = arith.constant 0 : i32
    %c0_i32_0 = arith.constant 0 : i32
    %c0_i32_1 = arith.constant 0 : i32
    return %c0_i32, %c0_i32_0 : i32, i32
  }
  func.func @transform_18(%arg0: i32) -> (i32, i32) {
    %c0_i32 = arith.constant 0 : i32
    %c0_i32_0 = arith.constant 0 : i32
    %c0_i32_1 = arith.constant 0 : i32
    return %c0_i32, %c0_i32_0 : i32, i32
  }
  func.func @transform_19(%arg0: i32) -> (i32, i32) {
    %c0_i32 = arith.constant 0 : i32
    %c0_i32_0 = arith.constant 0 : i32
    return %arg0, %c0_i32 : i32, i32
  }
}

</mosaic_0001>

<llo_original>
// kernel: ae_forward.1
$region0: #{ae_forward.1}
  #allocation0 [shape = 'u32[]', space=smem, size = 0x4, offset = 0x4, fixed_abs, tag = 'smem constant byte address 0x4 - core index']
  #allocation1 [shape = 'u32[72,128]{1,0:T(1,128)}', space=vmem, size = 0x9000, scoped, tag = 'internal scratch']
  %s0 = inlined_call_operand.vmem [shape: f32[16,16], index: 0, kind: input, shape index: {}]
  %s1 = inlined_call_operand.vmem [shape: f32[16,128], index: 1, kind: input, shape index: {}]
  %s2 = inlined_call_operand.vmem [shape: f32[1,128], index: 2, kind: input, shape index: {}]
  %s3 = inlined_call_operand.vmem [shape: f32[128,128], index: 3, kind: input, shape index: {}]
  %s4 = inlined_call_operand.vmem [shape: f32[1,128], index: 4, kind: input, shape index: {}]
  %s5 = inlined_call_operand.vmem [shape: f32[128,128], index: 5, kind: input, shape index: {}]
  %s6 = inlined_call_operand.vmem [shape: f32[1,128], index: 6, kind: input, shape index: {}]
  %s7 = inlined_call_operand.vmem [shape: f32[128,128], index: 7, kind: input, shape index: {}]
  %s8 = inlined_call_operand.vmem [shape: f32[1,128], index: 8, kind: input, shape index: {}]
  %s9 = inlined_call_operand.vmem [shape: f32[128,128], index: 9, kind: input, shape index: {}]
  %s10 = inlined_call_operand.vmem [shape: f32[1,128], index: 10, kind: input, shape index: {}]
  %s11 = inlined_call_operand.vmem [shape: f32[128,128], index: 11, kind: input, shape index: {}]
  %s12 = inlined_call_operand.vmem [shape: f32[1,128], index: 12, kind: input, shape index: {}]
  %s13 = inlined_call_operand.vmem [shape: f32[128,128], index: 13, kind: input, shape index: {}]
  %s14 = inlined_call_operand.vmem [shape: f32[1,128], index: 14, kind: input, shape index: {}]
  %s15 = inlined_call_operand.vmem [shape: f32[128,128], index: 15, kind: input, shape index: {}]
  %s16 = inlined_call_operand.vmem [shape: f32[1,128], index: 16, kind: input, shape index: {}]
  %s17 = inlined_call_operand.vmem [shape: f32[128,128], index: 17, kind: input, shape index: {}]
  %s18 = inlined_call_operand.vmem [shape: f32[1,128], index: 18, kind: input, shape index: {}]
  %s19 = inlined_call_operand.vmem [shape: f32[16,256], index: 19, kind: output, shape index: {}]
  %s20 = sld [smem:[#allocation0]]
  $region86: #{ae_forward.1} parent=0
    _
  %s22 = ssub.s32 1, %s20
  %s23 = scalar_select 0, %s22, %s20
  // Predicated region
  $region2: #{ae_forward.1} parent=0 // pred_check
    _
  $region3: #{ae_forward.1} parent=0 // pred_check_branch
    %25 = sbr.rel (0) target = $region5
  $region4: #{ae_forward.1} parent=0 // pred_region
    _
  $region5: #{ae_forward.1} parent=0 // pred_fallthru
    _
  // Predicated region
  $region6: #{ae_forward.1} parent=0 // pred_check
    _
  $region7: #{ae_forward.1} parent=0 // pred_check_branch
    %27 = sbr.rel (0) target = $region9
  $region8: #{ae_forward.1} parent=0 // pred_region
    _
  $region9: #{ae_forward.1} parent=0 // pred_fallthru
    _
  // Predicated region
  $region10: #{ae_forward.1} parent=0 // pred_check
    _
  $region11: #{ae_forward.1} parent=0 // pred_check_branch
    %29 = sbr.rel (0) target = $region13
  $region12: #{ae_forward.1} parent=0 // pred_region
    _
  $region13: #{ae_forward.1} parent=0 // pred_fallthru
    _
  // Predicated region
  $region14: #{ae_forward.1} parent=0 // pred_check
    _
  $region15: #{ae_forward.1} parent=0 // pred_check_branch
    %31 = sbr.rel (0) target = $region17
  $region16: #{ae_forward.1} parent=0 // pred_region
    _
  $region17: #{ae_forward.1} parent=0 // pred_fallthru
    _
  // Predicated region
  $region18: #{ae_forward.1} parent=0 // pred_check
    _
  $region19: #{ae_forward.1} parent=0 // pred_check_branch
    %33 = sbr.rel (0) target = $region21
  $region20: #{ae_forward.1} parent=0 // pred_region
    _
  $region21: #{ae_forward.1} parent=0 // pred_fallthru
    _
  // Predicated region
  $region22: #{ae_forward.1} parent=0 // pred_check
    _
  $region23: #{ae_forward.1} parent=0 // pred_check_branch
    %35 = sbr.rel (0) target = $region25
  $region24: #{ae_forward.1} parent=0 // pred_region
    _
  $region25: #{ae_forward.1} parent=0 // pred_fallthru
    _
  // Predicated region
  $region26: #{ae_forward.1} parent=0 // pred_check
    _
  $region27: #{ae_forward.1} parent=0 // pred_check_branch
    %37 = sbr.rel (0) target = $region29
  $region28: #{ae_forward.1} parent=0 // pred_region
    _
  $region29: #{ae_forward.1} parent=0 // pred_fallthru
    _
  // Predicated region
  $region30: #{ae_forward.1} parent=0 // pred_check
    _
  $region31: #{ae_forward.1} parent=0 // pred_check_branch
    %39 = sbr.rel (0) target = $region33
  $region32: #{ae_forward.1} parent=0 // pred_region
    _
  $region33: #{ae_forward.1} parent=0 // pred_fallthru
    _
  // Predicated region
  $region34: #{ae_forward.1} parent=0 // pred_check
    _
  $region35: #{ae_forward.1} parent=0 // pred_check_branch
    %41 = sbr.rel (0) target = $region37
  $region36: #{ae_forward.1} parent=0 // pred_region
    _
  $region37: #{ae_forward.1} parent=0 // pred_fallthru
    _
  // Predicated region
  $region38: #{ae_forward.1} parent=0 // pred_check
    _
  $region39: #{ae_forward.1} parent=0 // pred_check_branch
    %43 = sbr.rel (0) target = $region41
  $region40: #{ae_forward.1} parent=0 // pred_region
    _
  $region41: #{ae_forward.1} parent=0 // pred_fallthru
    _
  // Predicated region
  $region42: #{ae_forward.1} parent=0 // pred_check
    _
  $region43: #{ae_forward.1} parent=0 // pred_check_branch
    %45 = sbr.rel (0) target = $region45
  $region44: #{ae_forward.1} parent=0 // pred_region
    _
  $region45: #{ae_forward.1} parent=0 // pred_fallthru
    _
  // Predicated region
  $region46: #{ae_forward.1} parent=0 // pred_check
    _
  $region47: #{ae_forward.1} parent=0 // pred_check_branch
    %47 = sbr.rel (0) target = $region49
  $region48: #{ae_forward.1} parent=0 // pred_region
    _
  $region49: #{ae_forward.1} parent=0 // pred_fallthru
    _
  // Predicated region
  $region50: #{ae_forward.1} parent=0 // pred_check
    _
  $region51: #{ae_forward.1} parent=0 // pred_check_branch
    %49 = sbr.rel (0) target = $region53
  $region52: #{ae_forward.1} parent=0 // pred_region
    _
  $region53: #{ae_forward.1} parent=0 // pred_fallthru
    _
  // Predicated region
  $region54: #{ae_forward.1} parent=0 // pred_check
    _
  $region55: #{ae_forward.1} parent=0 // pred_check_branch
    %51 = sbr.rel (0) target = $region57
  $region56: #{ae_forward.1} parent=0 // pred_region
    _
  $region57: #{ae_forward.1} parent=0 // pred_fallthru
    _
  // Predicated region
  $region58: #{ae_forward.1} parent=0 // pred_check
    _
  $region59: #{ae_forward.1} parent=0 // pred_check_branch
    %53 = sbr.rel (0) target = $region61
  $region60: #{ae_forward.1} parent=0 // pred_region
    _
  $region61: #{ae_forward.1} parent=0 // pred_fallthru
    _
  // Predicated region
  $region62: #{ae_forward.1} parent=0 // pred_check
    _
  $region63: #{ae_forward.1} parent=0 // pred_check_branch
    %55 = sbr.rel (0) target = $region65
  $region64: #{ae_forward.1} parent=0 // pred_region
    _
  $region65: #{ae_forward.1} parent=0 // pred_fallthru
    _
  // Predicated region
  $region66: #{ae_forward.1} parent=0 // pred_check
    _
  $region67: #{ae_forward.1} parent=0 // pred_check_branch
    %57 = sbr.rel (0) target = $region69
  $region68: #{ae_forward.1} parent=0 // pred_region
    _
  $region69: #{ae_forward.1} parent=0 // pred_fallthru
    _
  // Predicated region
  $region70: #{ae_forward.1} parent=0 // pred_check
    _
  $region71: #{ae_forward.1} parent=0 // pred_check_branch
    %59 = sbr.rel (0) target = $region73
  $region72: #{ae_forward.1} parent=0 // pred_region
    _
  $region73: #{ae_forward.1} parent=0 // pred_fallthru
    _
  // Predicated region
  $region74: #{ae_forward.1} parent=0 // pred_check
    _
  $region75: #{ae_forward.1} parent=0 // pred_check_branch
    %61 = sbr.rel (0) target = $region77
  $region76: #{ae_forward.1} parent=0 // pred_region
    _
  $region77: #{ae_forward.1} parent=0 // pred_fallthru
    _
  %v62 = vld [vmem:[%s0] sm:$0xff]
  %v63 = vld [vmem:[%s0 + $0x8] sm:$0xff]
  %v64 = vld [vmem:[%s1] sm:$0xff]
  %v65 = vld [vmem:[%s1 + $0x8] sm:$0xff]
  %v66 = vld [vmem:[%s2] sm:$0x1]
  %v68 = vperm.slane %v66, 0
  %vm70 = vcmask 130048
  %v72 = vsel %vm70, %v62, 0
  %v75 = vsel %vm70, %v63, 0
  %77 = vmatpush.msra.mxu0 0.0
  %78 = vmatpush.msra.mxu0 0.0
  %79 = vmatpush.msra.mxu0 0.0
  %80 = vmatpush.msra.mxu0 0.0
  %81 = vmatpush.msra.mxu0 0.0
  %82 = vmatpush.msra.mxu0 0.0
  %83 = vmatpush.msra.mxu0 0.0
  %84 = vmatpush.msra.mxu0 0.0
  %85 = vmatpush.msra.mxu0 0.0
  %86 = vmatpush.msra.mxu0 0.0
  %87 = vmatpush.msra.mxu0 0.0
  %88 = vmatpush.msra.mxu0 0.0
  %89 = vmatpush.msra.mxu0 0.0
  %90 = vmatpush.msra.mxu0 0.0
  %91 = vmatpush.msra.mxu0 %v65
  %92 = vmatpush.msra.mxu0 %v64
  %93 = vmatmul.f32.gmra.mxu0 %v72
  %v94 = vpop.f32.mrf.mxu0
  %v95 = vadd.f32 %v68, %v94
  %96 = vmatmul.f32.gmra.mxu0 %v75
  %v97 = vpop.f32.mrf.mxu0
  %v98 = vadd.f32 %v68, %v97
  %99 = vdwg.mxu0
  %v100 = vmax.f32 %v95, 0.0
  %v101 = vmax.f32 %v98, 0.0
  %104 = vrot.lane.b32.xlu0 %v100, 64
  %v105 = vpop.permute.xlu0 %104
  %106 = vrot.lane.b32.xlu0 %v101, 64
  %v107 = vpop.permute.xlu0 %106
  %vm110 = vcmask 785920
  %111 = vst.msk [vmem:[%s19] sm:$0xff] %vm110, %v105
  %112 = vst.msk [vmem:[%s19 + $0x10] sm:$0xff] %vm110, %v107
  %v113 = vld [vmem:[%s3] sm:$0xff]
  %v114 = vld [vmem:[%s3 + $0x8] sm:$0xff]
  %v115 = vld [vmem:[%s3 + $0x10] sm:$0xff]
  %v116 = vld [vmem:[%s3 + $0x18] sm:$0xff]
  %v117 = vld [vmem:[%s3 + $0x20] sm:$0xff]
  %v118 = vld [vmem:[%s3 + $0x28] sm:$0xff]
  %v119 = vld [vmem:[%s3 + $0x30] sm:$0xff]
  %v120 = vld [vmem:[%s3 + $0x38] sm:$0xff]
  %v121 = vld [vmem:[%s3 + $0x40] sm:$0xff]
  %v122 = vld [vmem:[%s3 + $0x48] sm:$0xff]
  %v123 = vld [vmem:[%s3 + $0x50] sm:$0xff]
  %v124 = vld [vmem:[%s3 + $0x58] sm:$0xff]
  %v125 = vld [vmem:[%s3 + $0x60] sm:$0xff]
  %v126 = vld [vmem:[%s3 + $0x68] sm:$0xff]
  %v127 = vld [vmem:[%s3 + $0x70] sm:$0xff]
  %v128 = vld [vmem:[%s3 + $0x78] sm:$0xff]
  %v129 = vld [vmem:[%s4] sm:$0x1]
  %v131 = vperm.slane %v129, 0
  %133 = vmatpush.msra.mxu0 %v128
  %134 = vmatpush.msra.mxu0 %v127
  %135 = vmatpush.msra.mxu0 %v126
  %136 = vmatpush.msra.mxu0 %v125
  %137 = vmatpush.msra.mxu0 %v124
  %138 = vmatpush.msra.mxu0 %v123
  %139 = vmatpush.msra.mxu0 %v122
  %140 = vmatpush.msra.mxu0 %v121
  %141 = vmatpush.msra.mxu0 %v120
  %142 = vmatpush.msra.mxu0 %v119
  %143 = vmatpush.msra.mxu0 %v118
  %144 = vmatpush.msra.mxu0 %v117
  %145 = vmatpush.msra.mxu0 %v116
  %146 = vmatpush.msra.mxu0 %v115
  %147 = vmatpush.msra.mxu0 %v114
  %148 = vmatpush.msra.mxu0 %v113
  %149 = vmatmul.f32.gmra.mxu0 %v100
  %v150 = vpop.f32.mrf.mxu0
  %v151 = vadd.f32 %v131, %v150
  %152 = vmatmul.f32.gmra.mxu0 %v101
  %v153 = vpop.f32.mrf.mxu0
  %v154 = vadd.f32 %v131, %v153
  %155 = vdwg.mxu0
  %v156 = vmax.f32 %v151, 0.0
  %v157 = vmax.f32 %v154, 0.0
  %160 = vrot.lane.b32.xlu0 %v156, 96
  %v161 = vpop.permute.xlu0 %160
  %162 = vrot.lane.b32.xlu0 %v157, 96
  %v163 = vpop.permute.xlu0 %162
  %vm166 = vcmask 1048320
  %167 = vst.msk [vmem:[%s19] sm:$0xff] %vm166, %v161
  %168 = vst.msk [vmem:[%s19 + $0x10] sm:$0xff] %vm166, %v163
  %v169 = vld [vmem:[%s5] sm:$0xff]
  %v170 = vld [vmem:[%s5 + $0x8] sm:$0xff]
  %v171 = vld [vmem:[%s5 + $0x10] sm:$0xff]
  %v172 = vld [vmem:[%s5 + $0x18] sm:$0xff]
  %v173 = vld [vmem:[%s5 + $0x20] sm:$0xff]
  %v174 = vld [vmem:[%s5 + $0x28] sm:$0xff]
  %v175 = vld [vmem:[%s5 + $0x30] sm:$0xff]
  %v176 = vld [vmem:[%s5 + $0x38] sm:$0xff]
  %v177 = vld [vmem:[%s5 + $0x40] sm:$0xff]
  %v178 = vld [vmem:[%s5 + $0x48] sm:$0xff]
  %v179 = vld [vmem:[%s5 + $0x50] sm:$0xff]
  %v180 = vld [vmem:[%s5 + $0x58] sm:$0xff]
  %v181 = vld [vmem:[%s5 + $0x60] sm:$0xff]
  %v182 = vld [vmem:[%s5 + $0x68] sm:$0xff]
  %v183 = vld [vmem:[%s5 + $0x70] sm:$0xff]
  %v184 = vld [vmem:[%s5 + $0x78] sm:$0xff]
  %v185 = vld [vmem:[%s6] sm:$0x1]
  %v187 = vperm.slane %v185, 0
  %189 = vmatpush.msra.mxu0 %v184
  %190 = vmatpush.msra.mxu0 %v183
  %191 = vmatpush.msra.mxu0 %v182
  %192 = vmatpush.msra.mxu0 %v181
  %193 = vmatpush.msra.mxu0 %v180
  %194 = vmatpush.msra.mxu0 %v179
  %195 = vmatpush.msra.mxu0 %v178
  %196 = vmatpush.msra.mxu0 %v177
  %197 = vmatpush.msra.mxu0 %v176
  %198 = vmatpush.msra.mxu0 %v175
  %199 = vmatpush.msra.mxu0 %v174
  %200 = vmatpush.msra.mxu0 %v173
  %201 = vmatpush.msra.mxu0 %v172
  %202 = vmatpush.msra.mxu0 %v171
  %203 = vmatpush.msra.mxu0 %v170
  %204 = vmatpush.msra.mxu0 %v169
  %205 = vmatmul.f32.gmra.mxu0 %v156
  %v206 = vpop.f32.mrf.mxu0
  %v207 = vadd.f32 %v187, %v206
  %208 = vmatmul.f32.gmra.mxu0 %v157
  %v209 = vpop.f32.mrf.mxu0
  %v210 = vadd.f32 %v187, %v209
  %211 = vdwg.mxu0
  %v212 = vmax.f32 %v207, 0.0
  %v213 = vmax.f32 %v210, 0.0
  %vm214 = vcmask 523264
  %215 = vst.msk [vmem:[%s19] sm:$0xff] %vm214, %v212
  %216 = vst.msk [vmem:[%s19 + $0x10] sm:$0xff] %vm214, %v213
  %v217 = vld [vmem:[%s7] sm:$0xff]
  %v218 = vld [vmem:[%s7 + $0x8] sm:$0xff]
  %v219 = vld [vmem:[%s7 + $0x10] sm:$0xff]
  %v220 = vld [vmem:[%s7 + $0x18] sm:$0xff]
  %v221 = vld [vmem:[%s7 + $0x20] sm:$0xff]
  %v222 = vld [vmem:[%s7 + $0x28] sm:$0xff]
  %v223 = vld [vmem:[%s7 + $0x30] sm:$0xff]
  %v224 = vld [vmem:[%s7 + $0x38] sm:$0xff]
  %v225 = vld [vmem:[%s7 + $0x40] sm:$0xff]
  %v226 = vld [vmem:[%s7 + $0x48] sm:$0xff]
  %v227 = vld [vmem:[%s7 + $0x50] sm:$0xff]
  %v228 = vld [vmem:[%s7 + $0x58] sm:$0xff]
  %v229 = vld [vmem:[%s7 + $0x60] sm:$0xff]
  %v230 = vld [vmem:[%s7 + $0x68] sm:$0xff]
  %v231 = vld [vmem:[%s7 + $0x70] sm:$0xff]
  %v232 = vld [vmem:[%s7 + $0x78] sm:$0xff]
  %v233 = vld [vmem:[%s8] sm:$0x1]
  %v235 = vperm.slane %v233, 0
  %237 = vmatpush.msra.mxu0 %v232
  %238 = vmatpush.msra.mxu0 %v231
  %239 = vmatpush.msra.mxu0 %v230
  %240 = vmatpush.msra.mxu0 %v229
  %241 = vmatpush.msra.mxu0 %v228
  %242 = vmatpush.msra.mxu0 %v227
  %243 = vmatpush.msra.mxu0 %v226
  %244 = vmatpush.msra.mxu0 %v225
  %245 = vmatpush.msra.mxu0 %v224
  %246 = vmatpush.msra.mxu0 %v223
  %247 = vmatpush.msra.mxu0 %v222
  %248 = vmatpush.msra.mxu0 %v221
  %249 = vmatpush.msra.mxu0 %v220
  %250 = vmatpush.msra.mxu0 %v219
  %251 = vmatpush.msra.mxu0 %v218
  %252 = vmatpush.msra.mxu0 %v217
  %253 = vmatmul.f32.gmra.mxu0 %v212
  %v254 = vpop.f32.mrf.mxu0
  %v255 = vadd.f32 %v235, %v254
  %256 = vmatmul.f32.gmra.mxu0 %v213
  %v257 = vpop.f32.mrf.mxu0
  %v258 = vadd.f32 %v235, %v257
  %259 = vdwg.mxu0
  %262 = vrot.lane.b32.xlu0 %v255, 16
  %v263 = vpop.permute.xlu0 %262
  %264 = vrot.lane.b32.xlu0 %v258, 16
  %v265 = vpop.permute.xlu0 %264
  %vm268 = vcmask 162944
  %269 = vst.msk [vmem:[%s19 + $0x8] sm:$0xff] %vm268, %v263
  %270 = vst.msk [vmem:[%s19 + $0x18] sm:$0xff] %vm268, %v265
  %v271 = vld [vmem:[%s9] sm:$0xff]
  %v272 = vld [vmem:[%s9 + $0x8] sm:$0xff]
  %v273 = vld [vmem:[%s9 + $0x10] sm:$0xff]
  %v274 = vld [vmem:[%s9 + $0x18] sm:$0xff]
  %v275 = vld [vmem:[%s9 + $0x20] sm:$0xff]
  %v276 = vld [vmem:[%s9 + $0x28] sm:$0xff]
  %v277 = vld [vmem:[%s9 + $0x30] sm:$0xff]
  %v278 = vld [vmem:[%s9 + $0x38] sm:$0xff]
  %v279 = vld [vmem:[%s9 + $0x40] sm:$0xff]
  %v280 = vld [vmem:[%s9 + $0x48] sm:$0xff]
  %v281 = vld [vmem:[%s9 + $0x50] sm:$0xff]
  %v282 = vld [vmem:[%s9 + $0x58] sm:$0xff]
  %v283 = vld [vmem:[%s9 + $0x60] sm:$0xff]
  %v284 = vld [vmem:[%s9 + $0x68] sm:$0xff]
  %v285 = vld [vmem:[%s9 + $0x70] sm:$0xff]
  %v286 = vld [vmem:[%s9 + $0x78] sm:$0xff]
  %v287 = vld [vmem:[%s10] sm:$0x1]
  %v289 = vperm.slane %v287, 0
  %291 = vmatpush.msra.mxu0 %v286
  %292 = vmatpush.msra.mxu0 %v285
  %293 = vmatpush.msra.mxu0 %v284
  %294 = vmatpush.msra.mxu0 %v283
  %295 = vmatpush.msra.mxu0 %v282
  %296 = vmatpush.msra.mxu0 %v281
  %297 = vmatpush.msra.mxu0 %v280
  %298 = vmatpush.msra.mxu0 %v279
  %299 = vmatpush.msra.mxu0 %v278
  %300 = vmatpush.msra.mxu0 %v277
  %301 = vmatpush.msra.mxu0 %v276
  %302 = vmatpush.msra.mxu0 %v275
  %303 = vmatpush.msra.mxu0 %v274
  %304 = vmatpush.msra.mxu0 %v273
  %305 = vmatpush.msra.mxu0 %v272
  %306 = vmatpush.msra.mxu0 %v271
  %307 = vmatmul.f32.gmra.mxu0 %v255
  %v308 = vpop.f32.mrf.mxu0
  %v309 = vadd.f32 %v289, %v308
  %310 = vmatmul.f32.gmra.mxu0 %v258
  %v311 = vpop.f32.mrf.mxu0
  %v312 = vadd.f32 %v289, %v311
  %313 = vdwg.mxu0
  %v314 = vmax.f32 %v309, 0.0
  %v315 = vmax.f32 %v312, 0.0
  %v316 = vld [vmem:[%s11] sm:$0xff]
  %v317 = vld [vmem:[%s11 + $0x8] sm:$0xff]
  %v318 = vld [vmem:[%s11 + $0x10] sm:$0xff]
  %v319 = vld [vmem:[%s11 + $0x18] sm:$0xff]
  %v320 = vld [vmem:[%s11 + $0x20] sm:$0xff]
  %v321 = vld [vmem:[%s11 + $0x28] sm:$0xff]
  %v322 = vld [vmem:[%s11 + $0x30] sm:$0xff]
  %v323 = vld [vmem:[%s11 + $0x38] sm:$0xff]
  %v324 = vld [vmem:[%s11 + $0x40] sm:$0xff]
  %v325 = vld [vmem:[%s11 + $0x48] sm:$0xff]
  %v326 = vld [vmem:[%s11 + $0x50] sm:$0xff]
  %v327 = vld [vmem:[%s11 + $0x58] sm:$0xff]
  %v328 = vld [vmem:[%s11 + $0x60] sm:$0xff]
  %v329 = vld [vmem:[%s11 + $0x68] sm:$0xff]
  %v330 = vld [vmem:[%s11 + $0x70] sm:$0xff]
  %v331 = vld [vmem:[%s11 + $0x78] sm:$0xff]
  %v332 = vld [vmem:[%s12] sm:$0x1]
  %v334 = vperm.slane %v332, 0
  %336 = vmatpush.msra.mxu0 %v331
  %337 = vmatpush.msra.mxu0 %v330
  %338 = vmatpush.msra.mxu0 %v329
  %339 = vmatpush.msra.mxu0 %v328
  %340 = vmatpush.msra.mxu0 %v327
  %341 = vmatpush.msra.mxu0 %v326
  %342 = vmatpush.msra.mxu0 %v325
  %343 = vmatpush.msra.mxu0 %v324
  %344 = vmatpush.msra.mxu0 %v323
  %345 = vmatpush.msra.mxu0 %v322
  %346 = vmatpush.msra.mxu0 %v321
  %347 = vmatpush.msra.mxu0 %v320
  %348 = vmatpush.msra.mxu0 %v319
  %349 = vmatpush.msra.mxu0 %v318
  %350 = vmatpush.msra.mxu0 %v317
  %351 = vmatpush.msra.mxu0 %v316
  %352 = vmatmul.f32.gmra.mxu0 %v314
  %v353 = vpop.f32.mrf.mxu0
  %v354 = vadd.f32 %v334, %v353
  %355 = vmatmul.f32.gmra.mxu0 %v315
  %v356 = vpop.f32.mrf.mxu0
  %v357 = vadd.f32 %v334, %v356
  %358 = vdwg.mxu0
  %v359 = vmax.f32 %v354, 0.0
  %v360 = vmax.f32 %v357, 0.0
  %v361 = vld [vmem:[%s13] sm:$0xff]
  %v362 = vld [vmem:[%s13 + $0x8] sm:$0xff]
  %v363 = vld [vmem:[%s13 + $0x10] sm:$0xff]
  %v364 = vld [vmem:[%s13 + $0x18] sm:$0xff]
  %v365 = vld [vmem:[%s13 + $0x20] sm:$0xff]
  %v366 = vld [vmem:[%s13 + $0x28] sm:$0xff]
  %v367 = vld [vmem:[%s13 + $0x30] sm:$0xff]
  %v368 = vld [vmem:[%s13 + $0x38] sm:$0xff]
  %v369 = vld [vmem:[%s13 + $0x40] sm:$0xff]
  %v370 = vld [vmem:[%s13 + $0x48] sm:$0xff]
  %v371 = vld [vmem:[%s13 + $0x50] sm:$0xff]
  %v372 = vld [vmem:[%s13 + $0x58] sm:$0xff]
  %v373 = vld [vmem:[%s13 + $0x60] sm:$0xff]
  %v374 = vld [vmem:[%s13 + $0x68] sm:$0xff]
  %v375 = vld [vmem:[%s13 + $0x70] sm:$0xff]
  %v376 = vld [vmem:[%s13 + $0x78] sm:$0xff]
  %v377 = vld [vmem:[%s14] sm:$0x1]
  %v379 = vperm.slane %v377, 0
  %381 = vmatpush.msra.mxu0 %v376
  %382 = vmatpush.msra.mxu0 %v375
  %383 = vmatpush.msra.mxu0 %v374
  %384 = vmatpush.msra.mxu0 %v373
  %385 = vmatpush.msra.mxu0 %v372
  %386 = vmatpush.msra.mxu0 %v371
  %387 = vmatpush.msra.mxu0 %v370
  %388 = vmatpush.msra.mxu0 %v369
  %389 = vmatpush.msra.mxu0 %v368
  %390 = vmatpush.msra.mxu0 %v367
  %391 = vmatpush.msra.mxu0 %v366
  %392 = vmatpush.msra.mxu0 %v365
  %393 = vmatpush.msra.mxu0 %v364
  %394 = vmatpush.msra.mxu0 %v363
  %395 = vmatpush.msra.mxu0 %v362
  %396 = vmatpush.msra.mxu0 %v361
  %397 = vmatmul.f32.gmra.mxu0 %v359
  %v398 = vpop.f32.mrf.mxu0
  %v399 = vadd.f32 %v379, %v398
  %400 = vmatmul.f32.gmra.mxu0 %v360
  %v401 = vpop.f32.mrf.mxu0
  %v402 = vadd.f32 %v379, %v401
  %403 = vdwg.mxu0
  %v404 = vmax.f32 %v399, 0.0
  %v405 = vmax.f32 %v402, 0.0
  %v406 = vld [vmem:[%s15] sm:$0xff]
  %v407 = vld [vmem:[%s15 + $0x8] sm:$0xff]
  %v408 = vld [vmem:[%s15 + $0x10] sm:$0xff]
  %v409 = vld [vmem:[%s15 + $0x18] sm:$0xff]
  %v410 = vld [vmem:[%s15 + $0x20] sm:$0xff]
  %v411 = vld [vmem:[%s15 + $0x28] sm:$0xff]
  %v412 = vld [vmem:[%s15 + $0x30] sm:$0xff]
  %v413 = vld [vmem:[%s15 + $0x38] sm:$0xff]
  %v414 = vld [vmem:[%s15 + $0x40] sm:$0xff]
  %v415 = vld [vmem:[%s15 + $0x48] sm:$0xff]
  %v416 = vld [vmem:[%s15 + $0x50] sm:$0xff]
  %v417 = vld [vmem:[%s15 + $0x58] sm:$0xff]
  %v418 = vld [vmem:[%s15 + $0x60] sm:$0xff]
  %v419 = vld [vmem:[%s15 + $0x68] sm:$0xff]
  %v420 = vld [vmem:[%s15 + $0x70] sm:$0xff]
  %v421 = vld [vmem:[%s15 + $0x78] sm:$0xff]
  %v422 = vld [vmem:[%s16] sm:$0x1]
  %v424 = vperm.slane %v422, 0
  %426 = vmatpush.msra.mxu0 %v421
  %427 = vmatpush.msra.mxu0 %v420
  %428 = vmatpush.msra.mxu0 %v419
  %429 = vmatpush.msra.mxu0 %v418
  %430 = vmatpush.msra.mxu0 %v417
  %431 = vmatpush.msra.mxu0 %v416
  %432 = vmatpush.msra.mxu0 %v415
  %433 = vmatpush.msra.mxu0 %v414
  %434 = vmatpush.msra.mxu0 %v413
  %435 = vmatpush.msra.mxu0 %v412
  %436 = vmatpush.msra.mxu0 %v411
  %437 = vmatpush.msra.mxu0 %v410
  %438 = vmatpush.msra.mxu0 %v409
  %439 = vmatpush.msra.mxu0 %v408
  %440 = vmatpush.msra.mxu0 %v407
  %441 = vmatpush.msra.mxu0 %v406
  %442 = vmatmul.f32.gmra.mxu0 %v404
  %v443 = vpop.f32.mrf.mxu0
  %v444 = vadd.f32 %v424, %v443
  %445 = vmatmul.f32.gmra.mxu0 %v405
  %v446 = vpop.f32.mrf.mxu0
  %v447 = vadd.f32 %v424, %v446
  %448 = vdwg.mxu0
  %v449 = vmax.f32 %v444, 0.0
  %v450 = vmax.f32 %v447, 0.0
  %v451 = vld [vmem:[%s17] sm:$0xff]
  %v452 = vld [vmem:[%s17 + $0x8] sm:$0xff]
  %v453 = vld [vmem:[%s17 + $0x10] sm:$0xff]
  %v454 = vld [vmem:[%s17 + $0x18] sm:$0xff]
  %v455 = vld [vmem:[%s17 + $0x20] sm:$0xff]
  %v456 = vld [vmem:[%s17 + $0x28] sm:$0xff]
  %v457 = vld [vmem:[%s17 + $0x30] sm:$0xff]
  %v458 = vld [vmem:[%s17 + $0x38] sm:$0xff]
  %v459 = vld [vmem:[%s17 + $0x40] sm:$0xff]
  %v460 = vld [vmem:[%s17 + $0x48] sm:$0xff]
  %v461 = vld [vmem:[%s17 + $0x50] sm:$0xff]
  %v462 = vld [vmem:[%s17 + $0x58] sm:$0xff]
  %v463 = vld [vmem:[%s17 + $0x60] sm:$0xff]
  %v464 = vld [vmem:[%s17 + $0x68] sm:$0xff]
  %v465 = vld [vmem:[%s17 + $0x70] sm:$0xff]
  %v466 = vld [vmem:[%s17 + $0x78] sm:$0xff]
  %v467 = vld [vmem:[%s18] sm:$0x1]
  %v469 = vperm.slane %v467, 0
  %471 = vmatpush.msra.mxu0 %v466
  %472 = vmatpush.msra.mxu0 %v465
  %473 = vmatpush.msra.mxu0 %v464
  %474 = vmatpush.msra.mxu0 %v463
  %475 = vmatpush.msra.mxu0 %v462
  %476 = vmatpush.msra.mxu0 %v461
  %477 = vmatpush.msra.mxu0 %v460
  %478 = vmatpush.msra.mxu0 %v459
  %479 = vmatpush.msra.mxu0 %v458
  %480 = vmatpush.msra.mxu0 %v457
  %481 = vmatpush.msra.mxu0 %v456
  %482 = vmatpush.msra.mxu0 %v455
  %483 = vmatpush.msra.mxu0 %v454
  %484 = vmatpush.msra.mxu0 %v453
  %485 = vmatpush.msra.mxu0 %v452
  %486 = vmatpush.msra.mxu0 %v451
  %487 = vmatmul.f32.gmra.mxu0 %v449
  %v488 = vpop.f32.mrf.mxu0
  %v489 = vadd.f32 %v469, %v488
  %490 = vmatmul.f32.gmra.mxu0 %v450
  %v491 = vpop.f32.mrf.mxu0
  %v492 = vadd.f32 %v469, %v491
  %493 = vdwg.mxu0
  %494 = vst.msk [vmem:[%s19 + $0x8] sm:$0xff] %vm70, %v489
  %495 = vst.msk [vmem:[%s19 + $0x18] sm:$0xff] %vm70, %v492
  // Predicated region
  $region78: #{ae_forward.1} parent=0 // pred_check
    _
  $region79: #{ae_forward.1} parent=0 // pred_check_branch
    %497 = sbr.rel (0) target = $region81
  $region80: #{ae_forward.1} parent=0 // pred_region
    _
  $region81: #{ae_forward.1} parent=0 // pred_fallthru
    _
  // Predicated region
  $region82: #{ae_forward.1} parent=0 // pred_check
    _
  $region83: #{ae_forward.1} parent=0 // pred_check_branch
    %499 = sbr.rel (0) target = $region85
  $region84: #{ae_forward.1} parent=0 // pred_region
    _
  $region85: #{ae_forward.1} parent=0 // pred_fallthru
    _

</llo_original>
